<compile_context>
chip_gen: v5e
topology: v5e:2x2
jax: 0.10.0
libtpu: 0.0.40
codegen_flags: <defaults>
</compile_context>

<pallas_src>
import numpy as np
import jax
import jax.numpy as jnp
from jax.experimental import pallas as pl
from jax.experimental.pallas import tpu as pltpu


def _round_up(x, m):
    return ((x + m - 1) // m) * m


# ----------------------------------------------------------------------------
# Kernels
# ----------------------------------------------------------------------------
def _bnn_expand_kernel(s_ref, a_ref, inv_ref, w1_ref, b1_ref, w2_ref, b2_ref, o_ref):
    """One batch tile: tanh expansion + Linear/ReLU/Linear, single fused K dot."""
    x_in = jnp.concatenate([s_ref[...], a_ref[...]], axis=-1)      # (TB, S+A)
    t = jnp.tanh(x_in * inv_ref[...])                              # (TB, S+A)
    sc = jnp.sqrt(1.0 - t * t)                                     # symmetric complement
    x = jnp.concatenate([t, sc], axis=-1)                          # (TB, 2*(S+A))

    h = jnp.dot(x, w1_ref[...], preferred_element_type=jnp.float32) + b1_ref[...]
    h = jnp.maximum(h, 0.0)                                        # ReLU
    o = jnp.dot(h, w2_ref[...], preferred_element_type=jnp.float32) + b2_ref[...]
    o_ref[...] = o.astype(o_ref.dtype)


def _bnn_plain_kernel(s_ref, a_ref, w1_ref, b1_ref, w2_ref, b2_ref, o_ref):
    """input_expansion=False path: plain MLP head, single fused K dot."""
    x = jnp.concatenate([s_ref[...], a_ref[...]], axis=-1)         # (TB, S+A)
    h = jnp.dot(x, w1_ref[...], preferred_element_type=jnp.float32) + b1_ref[...]
    h = jnp.maximum(h, 0.0)
    o = jnp.dot(h, w2_ref[...], preferred_element_type=jnp.float32) + b2_ref[...]
    o_ref[...] = o.astype(o_ref.dtype)


# ----------------------------------------------------------------------------
# Wrapper
# ----------------------------------------------------------------------------
def bnn_forward(states, actions, params, input_bounds=None, *,
                input_expansion=True, tile_b=None):
    """states: (B, S) f32, actions: (B, A) f32 -> (B, S) f32."""
    states = states.astype(jnp.float32)
    actions = actions.astype(jnp.float32)
    B, S = states.shape
    _, A = actions.shape

    w1 = params["w1"].astype(jnp.float32)
    b1 = params["b1"].astype(jnp.float32).reshape(1, -1)
    w2 = params["w2"].astype(jnp.float32)
    b2 = params["b2"].astype(jnp.float32).reshape(1, -1)
    hidden = w1.shape[1]
    out_dim = w2.shape[1]
    k1 = w1.shape[0]                      # 2*(S+A) or (S+A)

    # Hidden dim padded to a lane-dense multiple of 128; zeros are inert
    # (padded hidden cols have 0 bias and 0 rows in w2).  The OUTPUT is NOT
    # padded: w2/b2 keep their true out_dim columns so the kernel writes only
    # useful bytes to HBM.
    Hp = _round_up(hidden, 128)
    w1p = jnp.pad(w1, ((0, 0), (0, Hp - hidden)))
    b1p = jnp.pad(b1, ((0, 0), (0, Hp - hidden)))
    w2p = jnp.pad(w2, ((0, Hp - hidden), (0, 0)))                  # (Hp, out_dim)

    # Batch tiling: fat tiles (cap 2048), but aim for >= 2 grid blocks so both
    # TensorCores are used on v7x.  Any batch size works via row zero-padding.
    if tile_b is None:
        half = max((B + 1) // 2, 8)
        tile_b = min(2048, _round_up(half, 8))
        if tile_b >= 256:
            tile_b = min(2048, _round_up(tile_b, 256))
    tile_b = _round_up(tile_b, 8)
    Bp = _round_up(B, tile_b)
    if Bp != B:
        states = jnp.pad(states, ((0, Bp - B), (0, 0)))
        actions = jnp.pad(actions, ((0, Bp - B), (0, 0)))
    grid = (Bp // tile_b,)

    batch_map = lambda i: (i, 0)
    full_map = lambda i: (0, 0)

    if input_expansion:
        ib = input_bounds.astype(jnp.float32).reshape(1, S + A)
        # Precompute 2 / bounds.  No zero-guard: x * (2/0) == +-inf / NaN,
        # exactly matching PyTorch's tanh(2*x/0) behavior.
        inv = 2.0 / ib
        in_specs = [
            pl.BlockSpec((tile_b, S), batch_map),        # states tile
            pl.BlockSpec((tile_b, A), batch_map),        # actions tile
            pl.BlockSpec((1, S + A), full_map),          # 2 / bounds
            pl.BlockSpec((k1, Hp), full_map),            # w1 (fused, 2*(S+A) rows)
            pl.BlockSpec((1, Hp), full_map),             # b1
            pl.BlockSpec((Hp, out_dim), full_map),       # w2 (narrow output)
            pl.BlockSpec((1, out_dim), full_map),        # b2
        ]
        operands = (states, actions, inv, w1p, b1p, w2p, b2)
        kernel = _bnn_expand_kernel
    else:
        in_specs = [
            pl.BlockSpec((tile_b, S), batch_map),
            pl.BlockSpec((tile_b, A), batch_map),
            pl.BlockSpec((k1, Hp), full_map),
            pl.BlockSpec((1, Hp), full_map),
            pl.BlockSpec((Hp, out_dim), full_map),
            pl.BlockSpec((1, out_dim), full_map),
        ]
        operands = (states, actions, w1p, b1p, w2p, b2)
        kernel = _bnn_plain_kernel

    out = pl.pallas_call(
        kernel,
        out_shape=jax.ShapeDtypeStruct((Bp, out_dim), jnp.float32),
        grid=grid,
        in_specs=in_specs,
        out_specs=pl.BlockSpec((tile_b, out_dim), batch_map),
        compiler_params=pltpu.CompilerParams(
            dimension_semantics=("parallel",)),
    )(*operands)

    return out[:B] if Bp != B else out


# ----------------------------------------------------------------------------
# Parameters / reference
# ----------------------------------------------------------------------------
def make_params(key, state_dim, action_dim, hidden, input_expansion=True):
    """Deterministic PyTorch-Linear-style init (uniform +-1/sqrt(fan_in))."""
    d_in = state_dim + action_dim
    d_model_in = 2 * d_in if input_expansion else d_in
    k1, k2, k3, k4 = jax.random.split(key, 4)
    lim1 = 1.0 / np.sqrt(d_model_in)
    lim2 = 1.0 / np.sqrt(hidden)
    return {
        "w1": jax.random.uniform(k1, (d_model_in, hidden), jnp.float32, -lim1, lim1),
        "b1": jax.random.uniform(k2, (1, hidden), jnp.float32, -lim1, lim1),
        "w2": jax.random.uniform(k3, (hidden, state_dim), jnp.float32, -lim2, lim2),
        "b2": jax.random.uniform(k4, (1, state_dim), jnp.float32, -lim2, lim2),
    }


def reference_forward(states, actions, params, input_bounds=None, input_expansion=True):
    """Pure-JAX reference mirroring the PyTorch forward."""
    x = jnp.concatenate([states, actions], axis=1)
    if input_expansion:
        t = jnp.tanh(2.0 * x / input_bounds[None, :])
        sc = jnp.sqrt(1.0 - jnp.square(t))
        x = jnp.concatenate([t, sc], axis=1)
    h = jnp.maximum(x @ params["w1"] + params["b1"], 0.0)
    return h @ params["w2"] + params["b2"]


# ----------------------------------------------------------------------------
# Demo / self-test
# ----------------------------------------------------------------------------
if __name__ == "__main__":
    batch, state_dim, action_dim, hidden = 16, 4, 4, 32
    d_in = state_dim + action_dim

    # Deterministic bounds dicts, like the PyTorch __init__ builds input_bounds.
    state_bounds = {i: np.array([-(i + 1.0), (i + 1.0) * 2.0], np.float32)
                    for i in range(state_dim)}
    action_bounds = {i: np.array([-0.5 * (i + 1.0), 0.5 * (i + 1.0)], np.float32)
                     for i in range(action_dim)}
    input_bounds = np.empty(d_in, np.float32)
    for i in range(state_dim):
        input_bounds[i] = np.max(np.abs(state_bounds[i]))
    for i in range(action_dim):
        input_bounds[state_dim + i] = np.max(np.abs(action_bounds[i]))
    input_bounds = jnp.asarray(input_bounds)

    key = jax.random.PRNGKey(0)
    ks, ka, kp, kq = jax.random.split(key, 4)
    states = jax.random.normal(ks, (batch, state_dim), jnp.float32)
    actions = jax.random.normal(ka, (batch, action_dim), jnp.float32)

    # --- input_expansion=True path (grid has 2 batch blocks) ---
    params = make_params(kp, state_dim, action_dim, hidden, input_expansion=True)
    out = bnn_forward(states, actions, params, input_bounds, input_expansion=True)
    out = jax.block_until_ready(out)
    ref = reference_forward(states, actions, params, input_bounds, input_expansion=True)
    np.testing.assert_allclose(np.asarray(out), np.asarray(ref), rtol=1e-5, atol=1e-5)
    assert out.shape == (batch, state_dim)

    # --- non-divisible batch (exercises row padding) ---
    out_odd = bnn_forward(states[:13], actions[:13], params, input_bounds,
                          input_expansion=True)
    out_odd = jax.block_until_ready(out_odd)
    np.testing.assert_allclose(np.asarray(out_odd), np.asarray(ref)[:13],
                               rtol=1e-5, atol=1e-5)

    # --- input_expansion=False path ---
    params_ne = make_params(kq, state_dim, action_dim, hidden, input_expansion=False)
    out_ne = bnn_forward(states, actions, params_ne, input_expansion=False)
    out_ne = jax.block_until_ready(out_ne)
    ref_ne = reference_forward(states, actions, params_ne, input_expansion=False)
    np.testing.assert_allclose(np.asarray(out_ne), np.asarray(ref_ne),
                               rtol=1e-5, atol=1e-5)

    print("KERNEL_OK")
</pallas_src>

<mosaic_0001>
module attributes {stable_mosaic.version = 11 : i64} {
  func.func @_bnn_expand_kernel(%arg0: i32, %arg1: memref<8x4xf32, #tpu.memory_space<vmem>>, %arg2: memref<8x4xf32, #tpu.memory_space<vmem>>, %arg3: memref<1x8xf32, #tpu.memory_space<vmem>>, %arg4: memref<16x128xf32, #tpu.memory_space<vmem>>, %arg5: memref<1x128xf32, #tpu.memory_space<vmem>>, %arg6: memref<128x4xf32, #tpu.memory_space<vmem>>, %arg7: memref<1x4xf32, #tpu.memory_space<vmem>>, %arg8: memref<8x4xf32, #tpu.memory_space<vmem>>) attributes {dimension_semantics = [#tpu.dimension_semantics<parallel>], iteration_bounds = array<i64: 2>, scalar_prefetch = 0 : i64, scratch_operands = 0 : i64, tpu.core_type = #tpu.core_type<tc>, window_params = [{transform_indices = @transform_0, window_bounds = array<i64: 8, 4>}, {transform_indices = @transform_1, window_bounds = array<i64: 8, 4>}, {pipeline_mode = #tpu.pipeline_mode<synchronous>, transform_indices = @transform_2, window_bounds = array<i64: 1, 8>}, {pipeline_mode = #tpu.pipeline_mode<synchronous>, transform_indices = @transform_3, window_bounds = array<i64: 16, 128>}, {pipeline_mode = #tpu.pipeline_mode<synchronous>, transform_indices = @transform_4, window_bounds = array<i64: 1, 128>}, {pipeline_mode = #tpu.pipeline_mode<synchronous>, transform_indices = @transform_5, window_bounds = array<i64: 128, 4>}, {pipeline_mode = #tpu.pipeline_mode<synchronous>, transform_indices = @transform_6, window_bounds = array<i64: 1, 4>}, {transform_indices = @transform_7, window_bounds = array<i64: 8, 4>}]} {
    %c0 = arith.constant 0 : index
    %c0_0 = arith.constant 0 : index
    %0 = vector.load %arg1[%c0, %c0_0] : memref<8x4xf32, #tpu.memory_space<vmem>>, vector<8x4xf32>
    %c0_1 = arith.constant 0 : index
    %c0_2 = arith.constant 0 : index
    %1 = vector.load %arg2[%c0_1, %c0_2] : memref<8x4xf32, #tpu.memory_space<vmem>>, vector<8x4xf32>
    %2 = tpu.concatenate %0, %1 in 1 : vector<8x4xf32>, vector<8x4xf32> -> vector<8x8xf32>
    %c0_3 = arith.constant 0 : index
    %c0_4 = arith.constant 0 : index
    %3 = vector.load %arg3[%c0_3, %c0_4] : memref<1x8xf32, #tpu.memory_space<vmem>>, vector<1x8xf32>
    %4 = vector.broadcast %3 : vector<1x8xf32> to vector<8x8xf32>
    %5 = arith.mulf %2, %4 : vector<8x8xf32>
    %6 = math.tanh %5 : vector<8x8xf32>
    %7 = arith.mulf %6, %6 : vector<8x8xf32>
    %cst = arith.constant 1.000000e+00 : f32
    %8 = vector.broadcast %cst : f32 to vector<8x8xf32>
    %9 = arith.subf %8, %7 : vector<8x8xf32>
    %10 = math.sqrt %9 : vector<8x8xf32>
    %11 = tpu.concatenate %6, %10 in 1 : vector<8x8xf32>, vector<8x8xf32> -> vector<8x16xf32>
    %c0_5 = arith.constant 0 : index
    %c0_6 = arith.constant 0 : index
    %12 = vector.load %arg4[%c0_5, %c0_6] : memref<16x128xf32, #tpu.memory_space<vmem>>, vector<16x128xf32>
    %cst_7 = arith.constant dense<0.000000e+00> : vector<8x128xf32>
    %13 = tpu.matmul %11, %12, %cst_7 {dimension_numbers = #tpu.dot_dimension_numbers<[1], [0], [0], [1], [0, 0, 1, 1], [], []>} : vector<8x16xf32>, vector<16x128xf32>, vector<8x128xf32> -> vector<8x128xf32>
    %c0_8 = arith.constant 0 : index
    %c0_9 = arith.constant 0 : index
    %14 = vector.load %arg5[%c0_8, %c0_9] : memref<1x128xf32, #tpu.memory_space<vmem>>, vector<1x128xf32>
    %15 = vector.broadcast %14 : vector<1x128xf32> to vector<8x128xf32>
    %16 = arith.addf %13, %15 : vector<8x128xf32>
    %cst_10 = arith.constant 0.000000e+00 : f32
    %17 = vector.broadcast %cst_10 : f32 to vector<8x128xf32>
    %18 = arith.maximumf %16, %17 : vector<8x128xf32>
    %c0_11 = arith.constant 0 : index
    %c0_12 = arith.constant 0 : index
    %19 = vector.load %arg6[%c0_11, %c0_12] : memref<128x4xf32, #tpu.memory_space<vmem>>, vector<128x4xf32>
    %cst_13 = arith.constant dense<0.000000e+00> : vector<8x4xf32>
    %20 = tpu.matmul %18, %19, %cst_13 {dimension_numbers = #tpu.dot_dimension_numbers<[1], [0], [0], [1], [0, 0, 1, 1], [], []>} : vector<8x128xf32>, vector<128x4xf32>, vector<8x4xf32> -> vector<8x4xf32>
    %c0_14 = arith.constant 0 : index
    %c0_15 = arith.constant 0 : index
    %21 = vector.load %arg7[%c0_14, %c0_15] : memref<1x4xf32, #tpu.memory_space<vmem>>, vector<1x4xf32>
    %22 = vector.broadcast %21 : vector<1x4xf32> to vector<8x4xf32>
    %23 = arith.addf %20, %22 : vector<8x4xf32>
    %c0_16 = arith.constant 0 : index
    %c0_17 = arith.constant 0 : index
    %24 = vector.load %arg8[%c0_16, %c0_17] : memref<8x4xf32, #tpu.memory_space<vmem>>, vector<8x4xf32>
    tpu.vector_store %arg8[%c0_16, %c0_17], %23 {strides = array<i32>} : memref<8x4xf32, #tpu.memory_space<vmem>>, vector<8x4xf32>,
    return
  }
  func.func @transform_0(%arg0: i32) -> (i32, i32) {
    %c0_i32 = arith.constant 0 : i32
    %c0_i32_0 = arith.constant 0 : i32
    return %arg0, %c0_i32 : i32, i32
  }
  func.func @transform_1(%arg0: i32) -> (i32, i32) {
    %c0_i32 = arith.constant 0 : i32
    %c0_i32_0 = arith.constant 0 : i32
    return %arg0, %c0_i32 : i32, i32
  }
  func.func @transform_2(%arg0: i32) -> (i32, i32) {
    %c0_i32 = arith.constant 0 : i32
    %c0_i32_0 = arith.constant 0 : i32
    %c0_i32_1 = arith.constant 0 : i32
    return %c0_i32, %c0_i32_0 : i32, i32
  }
  func.func @transform_3(%arg0: i32) -> (i32, i32) {
    %c0_i32 = arith.constant 0 : i32
    %c0_i32_0 = arith.constant 0 : i32
    %c0_i32_1 = arith.constant 0 : i32
    return %c0_i32, %c0_i32_0 : i32, i32
  }
  func.func @transform_4(%arg0: i32) -> (i32, i32) {
    %c0_i32 = arith.constant 0 : i32
    %c0_i32_0 = arith.constant 0 : i32
    %c0_i32_1 = arith.constant 0 : i32
    return %c0_i32, %c0_i32_0 : i32, i32
  }
  func.func @transform_5(%arg0: i32) -> (i32, i32) {
    %c0_i32 = arith.constant 0 : i32
    %c0_i32_0 = arith.constant 0 : i32
    %c0_i32_1 = arith.constant 0 : i32
    return %c0_i32, %c0_i32_0 : i32, i32
  }
  func.func @transform_6(%arg0: i32) -> (i32, i32) {
    %c0_i32 = arith.constant 0 : i32
    %c0_i32_0 = arith.constant 0 : i32
    %c0_i32_1 = arith.constant 0 : i32
    return %c0_i32, %c0_i32_0 : i32, i32
  }
  func.func @transform_7(%arg0: i32) -> (i32, i32) {
    %c0_i32 = arith.constant 0 : i32
    %c0_i32_0 = arith.constant 0 : i32
    return %arg0, %c0_i32 : i32, i32
  }
}

</mosaic_0001>

<llo_original>
// kernel: tpu_custom_call.1
$region0: #{tpu_custom_call.1}
  #allocation0 [shape = 'u32[]', space=smem, size = 0x4, offset = 0x4, fixed_abs, tag = 'smem constant byte address 0x4 - core index']
  #allocation1 [shape = 'u32[72,128]{1,0:T(1,128)}', space=vmem, size = 0x9000, scoped, tag = 'internal scratch']
  %s0 = inlined_call_operand.vmem [shape: f32[16,4], index: 0, kind: input, shape index: {}]
  %s1 = inlined_call_operand.vmem [shape: f32[16,4], index: 1, kind: input, shape index: {}]
  %s2 = inlined_call_operand.vmem [shape: f32[1,8], index: 2, kind: input, shape index: {}]
  %s3 = inlined_call_operand.vmem [shape: f32[16,128], index: 3, kind: input, shape index: {}]
  %s4 = inlined_call_operand.vmem [shape: f32[1,128], index: 4, kind: input, shape index: {}]
  %s5 = inlined_call_operand.vmem [shape: f32[128,4], index: 5, kind: input, shape index: {}]
  %s6 = inlined_call_operand.vmem [shape: f32[1,4], index: 6, kind: input, shape index: {}]
  %s7 = inlined_call_operand.vmem [shape: f32[16,4], index: 7, kind: output, shape index: {}]
  %s8 = sld [smem:[#allocation0]]
  $region61: #{tpu_custom_call.1} parent=0
    _
  %s10 = ssub.s32 1, %s8
  %s11 = scalar_select 0, %s10, %s8
  loop: start=0, step=1, limit=4
  $region2: #{tpu_custom_call.1} parent=0 // loop_pre_header
    _
  $region3: #{tpu_custom_call.1} parent=0 // loop_header
    %s13 = sphi 0, %s17
    %p14 = scmp.ge.s32.totalorder %s13, 4
    %s23 = sphi 0, %s25
    %s26 = sphi 0, %s23
    %s27 = sphi 0, %s26
    %s43 = sphi 0, %s27
    %s49 = sphi 0, %s51
    %s52 = sphi 0, %s49
    %s53 = sphi 0, %s52
    %s69 = sphi 0, %s53
    %s73 = sphi 0, %s73
    %s75 = sphi 0, %s73
    %s76 = sphi 0, %s75
    %s90 = sphi 0, %s76
    %s94 = sphi 0, %s94
    %s96 = sphi 0, %s94
    %s97 = sphi 0, %s96
    %s111 = sphi 0, %s97
    %s115 = sphi 0, %s115
    %s117 = sphi 0, %s115
    %s118 = sphi 0, %s117
    %s132 = sphi 0, %s118
    %s136 = sphi 0, %s136
    %s138 = sphi 0, %s136
    %s139 = sphi 0, %s138
    %s153 = sphi 0, %s139
    %s157 = sphi 0, %s157
    %s159 = sphi 0, %s157
    %s160 = sphi 0, %s159
    %s174 = sphi 0, %s160
    %s180 = sphi 0, %s182
    %s183 = sphi 0, %s180
    %s184 = sphi 0, %s183
    %s200 = sphi 0, %s184
  $region4: #{tpu_custom_call.1} parent=0 // loop_header_branch
    %16 = sbr.rel (%p14) target = $region8
  $region5: #{tpu_custom_call.1} parent=0 // loop_body
    %s18 = ssub.s32 %s13, 1
    %s19 = ssub.s32 %s13, 2
    %s20 = sadd.s32 %s13, 1
    %s21 = ssub.s32 %s13, %s20
    %p22 = scmp.eq.s32.totalorder %s21, 0
    %s24 = sadd.s32 %s23, 1
    %s25 = scalar_select %p22, %s23, %s24
    %p28 = pneg %p22
    %p29 = scmp.eq.s32.totalorder %s13, 1
    %p30 = por %p28, %p29
    %p31 = scmp.ne.s32.totalorder %s23, %s26
    %p32 = scmp.eq.s32.totalorder %s13, 0
    %p33 = por %p31, %p32
    %p34 = scmp.ne.s32.totalorder %s23, %s26
    %p35 = scmp.eq.s32.totalorder %s18, 1
    %p36 = por %p34, %p35
    %p37 = scmp.ne.s32.totalorder %s26, %s27
    %p38 = scmp.eq.s32.totalorder %s18, 0
    %p39 = por %p37, %p38
    %p40 = scmp.ne.s32.totalorder %s26, %s27
    %p41 = scmp.eq.s32.totalorder %s19, 1
    %p42 = por %p40, %p41
    %p44 = scmp.ne.s32.totalorder %s27, %s43
    %p45 = scmp.eq.s32.totalorder %s19, 0
    %p46 = por %p44, %p45
    %s47 = ssub.s32 %s13, %s20
    %p48 = scmp.eq.s32.totalorder %s47, 0
    %s50 = sadd.s32 %s49, 1
    %s51 = scalar_select %p48, %s49, %s50
    %p54 = pneg %p48
    %p55 = scmp.eq.s32.totalorder %s13, 1
    %p56 = por %p54, %p55
    %p57 = scmp.ne.s32.totalorder %s49, %s52
    %p58 = scmp.eq.s32.totalorder %s13, 0
    %p59 = por %p57, %p58
    %p60 = scmp.ne.s32.totalorder %s49, %s52
    %p61 = scmp.eq.s32.totalorder %s18, 1
    %p62 = por %p60, %p61
    %p63 = scmp.ne.s32.totalorder %s52, %s53
    %p64 = scmp.eq.s32.totalorder %s18, 0
    %p65 = por %p63, %p64
    %p66 = scmp.ne.s32.totalorder %s52, %s53
    %p67 = scmp.eq.s32.totalorder %s19, 1
    %p68 = por %p66, %p67
    %p70 = scmp.ne.s32.totalorder %s53, %s69
    %p71 = scmp.eq.s32.totalorder %s19, 0
    %p72 = por %p70, %p71
    %s74 = sadd.s32 %s73, 1
    %p77 = scmp.eq.s32.totalorder %s13, 1
    %p78 = scmp.ne.s32.totalorder %s73, %s75
    %p79 = scmp.eq.s32.totalorder %s13, 0
    %p80 = por %p78, %p79
    %p81 = scmp.ne.s32.totalorder %s73, %s75
    %p82 = scmp.eq.s32.totalorder %s18, 1
    %p83 = por %p81, %p82
    %p84 = scmp.ne.s32.totalorder %s75, %s76
    %p85 = scmp.eq.s32.totalorder %s18, 0
    %p86 = por %p84, %p85
    %p87 = scmp.ne.s32.totalorder %s75, %s76
    %p88 = scmp.eq.s32.totalorder %s19, 1
    %p89 = por %p87, %p88
    %p91 = scmp.ne.s32.totalorder %s76, %s90
    %p92 = scmp.eq.s32.totalorder %s19, 0
    %p93 = por %p91, %p92
    %s95 = sadd.s32 %s94, 1
    %p98 = scmp.eq.s32.totalorder %s13, 1
    %p99 = scmp.ne.s32.totalorder %s94, %s96
    %p100 = scmp.eq.s32.totalorder %s13, 0
    %p101 = por %p99, %p100
    %p102 = scmp.ne.s32.totalorder %s94, %s96
    %p103 = scmp.eq.s32.totalorder %s18, 1
    %p104 = por %p102, %p103
    %p105 = scmp.ne.s32.totalorder %s96, %s97
    %p106 = scmp.eq.s32.totalorder %s18, 0
    %p107 = por %p105, %p106
    %p108 = scmp.ne.s32.totalorder %s96, %s97
    %p109 = scmp.eq.s32.totalorder %s19, 1
    %p110 = por %p108, %p109
    %p112 = scmp.ne.s32.totalorder %s97, %s111
    %p113 = scmp.eq.s32.totalorder %s19, 0
    %p114 = por %p112, %p113
    %s116 = sadd.s32 %s115, 1
    %p119 = scmp.eq.s32.totalorder %s13, 1
    %p120 = scmp.ne.s32.totalorder %s115, %s117
    %p121 = scmp.eq.s32.totalorder %s13, 0
    %p122 = por %p120, %p121
    %p123 = scmp.ne.s32.totalorder %s115, %s117
    %p124 = scmp.eq.s32.totalorder %s18, 1
    %p125 = por %p123, %p124
    %p126 = scmp.ne.s32.totalorder %s117, %s118
    %p127 = scmp.eq.s32.totalorder %s18, 0
    %p128 = por %p126, %p127
    %p129 = scmp.ne.s32.totalorder %s117, %s118
    %p130 = scmp.eq.s32.totalorder %s19, 1
    %p131 = por %p129, %p130
    %p133 = scmp.ne.s32.totalorder %s118, %s132
    %p134 = scmp.eq.s32.totalorder %s19, 0
    %p135 = por %p133, %p134
    %s137 = sadd.s32 %s136, 1
    %p140 = scmp.eq.s32.totalorder %s13, 1
    %p141 = scmp.ne.s32.totalorder %s136, %s138
    %p142 = scmp.eq.s32.totalorder %s13, 0
    %p143 = por %p141, %p142
    %p144 = scmp.ne.s32.totalorder %s136, %s138
    %p145 = scmp.eq.s32.totalorder %s18, 1
    %p146 = por %p144, %p145
    %p147 = scmp.ne.s32.totalorder %s138, %s139
    %p148 = scmp.eq.s32.totalorder %s18, 0
    %p149 = por %p147, %p148
    %p150 = scmp.ne.s32.totalorder %s138, %s139
    %p151 = scmp.eq.s32.totalorder %s19, 1
    %p152 = por %p150, %p151
    %p154 = scmp.ne.s32.totalorder %s139, %s153
    %p155 = scmp.eq.s32.totalorder %s19, 0
    %p156 = por %p154, %p155
    %s158 = sadd.s32 %s157, 1
    %p161 = scmp.eq.s32.totalorder %s13, 1
    %p162 = scmp.ne.s32.totalorder %s157, %s159
    %p163 = scmp.eq.s32.totalorder %s13, 0
    %p164 = por %p162, %p163
    %p165 = scmp.ne.s32.totalorder %s157, %s159
    %p166 = scmp.eq.s32.totalorder %s18, 1
    %p167 = por %p165, %p166
    %p168 = scmp.ne.s32.totalorder %s159, %s160
    %p169 = scmp.eq.s32.totalorder %s18, 0
    %p170 = por %p168, %p169
    %p171 = scmp.ne.s32.totalorder %s159, %s160
    %p172 = scmp.eq.s32.totalorder %s19, 1
    %p173 = por %p171, %p172
    %p175 = scmp.ne.s32.totalorder %s160, %s174
    %p176 = scmp.eq.s32.totalorder %s19, 0
    %p177 = por %p175, %p176
    %s178 = ssub.s32 %s13, %s20
    %p179 = scmp.eq.s32.totalorder %s178, 0
    %s181 = sadd.s32 %s180, 1
    %s182 = scalar_select %p179, %s180, %s181
    %p185 = pneg %p179
    %p186 = scmp.eq.s32.totalorder %s13, 1
    %p187 = por %p185, %p186
    %p188 = scmp.ne.s32.totalorder %s180, %s183
    %p189 = scmp.eq.s32.totalorder %s13, 0
    %p190 = por %p188, %p189
    %p191 = scmp.ne.s32.totalorder %s180, %s183
    %p192 = scmp.eq.s32.totalorder %s18, 1
    %p193 = por %p191, %p192
    %p194 = scmp.ne.s32.totalorder %s183, %s184
    %p195 = scmp.eq.s32.totalorder %s18, 0
    %p196 = por %p194, %p195
    %p197 = scmp.ne.s32.totalorder %s183, %s184
    %p198 = scmp.eq.s32.totalorder %s19, 1
    %p199 = por %p197, %p198
    %p201 = scmp.ne.s32.totalorder %s184, %s200
    %p202 = scmp.eq.s32.totalorder %s19, 0
    %p203 = por %p201, %p202
    %p204 = scmp.le.s32.totalorder 1, %s13
    %p205 = scmp.lt.s32.totalorder %s13, 3
    %p206 = pnand %p204, %p205
    %p207 = pneg %p206
    // Predicated region
    $region9: #{tpu_custom_call.1} parent=5 // pred_check
      _
    $region10: #{tpu_custom_call.1} parent=5 // pred_check_branch
      %209 = sbr.rel (%p206) target = $region12
    $region11: #{tpu_custom_call.1} parent=5 // pred_region
      %s210 = ssub.s32 %s13, 1
      // Predicated region
      $region13: #{tpu_custom_call.1} parent=11 // pred_check
        %p211 = pneg %p86
      $region14: #{tpu_custom_call.1} parent=11 // pred_check_branch
        %213 = sbr.rel (%p211) target = $region16
      $region15: #{tpu_custom_call.1} parent=11 // pred_region
        _
      $region16: #{tpu_custom_call.1} parent=11 // pred_fallthru
        _
      // Predicated region
      $region17: #{tpu_custom_call.1} parent=11 // pred_check
        %p214 = pneg %p107
      $region18: #{tpu_custom_call.1} parent=11 // pred_check_branch
        %216 = sbr.rel (%p214) target = $region20
      $region19: #{tpu_custom_call.1} parent=11 // pred_region
        _
      $region20: #{tpu_custom_call.1} parent=11 // pred_fallthru
        _
      // Predicated region
      $region21: #{tpu_custom_call.1} parent=11 // pred_check
        %p217 = pneg %p128
      $region22: #{tpu_custom_call.1} parent=11 // pred_check_branch
        %219 = sbr.rel (%p217) target = $region24
      $region23: #{tpu_custom_call.1} parent=11 // pred_region
        _
      $region24: #{tpu_custom_call.1} parent=11 // pred_fallthru
        _
      // Predicated region
      $region25: #{tpu_custom_call.1} parent=11 // pred_check
        %p220 = pneg %p149
      $region26: #{tpu_custom_call.1} parent=11 // pred_check_branch
        %222 = sbr.rel (%p220) target = $region28
      $region27: #{tpu_custom_call.1} parent=11 // pred_region
        _
      $region28: #{tpu_custom_call.1} parent=11 // pred_fallthru
        _
      // Predicated region
      $region29: #{tpu_custom_call.1} parent=11 // pred_check
        %p223 = pneg %p170
      $region30: #{tpu_custom_call.1} parent=11 // pred_check_branch
        %225 = sbr.rel (%p223) target = $region32
      $region31: #{tpu_custom_call.1} parent=11 // pred_region
        _
      $region32: #{tpu_custom_call.1} parent=11 // pred_fallthru
        _
    $region12: #{tpu_custom_call.1} parent=5 // pred_fallthru
      _
    %p226 = scmp.lt.s32.totalorder %s13, 2
    // Predicated region
    $region33: #{tpu_custom_call.1} parent=5 // pred_check
      %p227 = pneg %p226
    $region34: #{tpu_custom_call.1} parent=5 // pred_check_branch
      %229 = sbr.rel (%p227) target = $region36
    $region35: #{tpu_custom_call.1} parent=5 // pred_region
      // Predicated region
      $region37: #{tpu_custom_call.1} parent=35 // pred_check
        %p230 = pneg %p33
      $region38: #{tpu_custom_call.1} parent=35 // pred_check_branch
        %232 = sbr.rel (%p230) target = $region40
      $region39: #{tpu_custom_call.1} parent=35 // pred_region
        %p233 = scmp.lt.s32.totalorder %s13, 1
        %s234 = scalar_select %p233, %s13, 1
        %s235 = smul.addr %s234, 8
        %s236 = scalar_lea.vmem %s0, %s235
      $region40: #{tpu_custom_call.1} parent=35 // pred_fallthru
        _
      // Predicated region
      $region41: #{tpu_custom_call.1} parent=35 // pred_check
        %p237 = pneg %p59
      $region42: #{tpu_custom_call.1} parent=35 // pred_check_branch
        %239 = sbr.rel (%p237) target = $region44
      $region43: #{tpu_custom_call.1} parent=35 // pred_region
        %p240 = scmp.lt.s32.totalorder %s13, 1
        %s241 = scalar_select %p240, %s13, 1
        %s242 = smul.addr %s241, 8
        %s243 = scalar_lea.vmem %s1, %s242
      $region44: #{tpu_custom_call.1} parent=35 // pred_fallthru
        _
    $region36: #{tpu_custom_call.1} parent=5 // pred_fallthru
      _
    %p244 = scmp.le.s32.totalorder 1, %s13
    %p245 = scmp.lt.s32.totalorder %s13, 3
    %p246 = pnand %p244, %p245
    %p247 = pneg %p246
    // Predicated region
    $region45: #{tpu_custom_call.1} parent=5 // pred_check
      _
    $region46: #{tpu_custom_call.1} parent=5 // pred_check_branch
      %249 = sbr.rel (%p246) target = $region48
    $region47: #{tpu_custom_call.1} parent=5 // pred_region
      %s250 = ssub.s32 %s13, 1
      %p251 = scmp.lt.s32.totalorder %s18, 1
      %s252 = scalar_select %p251, %s18, 1
      %s253 = smul.addr %s252, 8
      %s254 = scalar_lea.vmem %s0, %s253
      %p255 = pneg %p39
      %p256 = pneg %p36
      %p257 = scmp.lt.s32.totalorder %s18, 1
      %s258 = scalar_select %p257, %s18, 1
      %s259 = smul.addr %s258, 8
      %s260 = scalar_lea.vmem %s1, %s259
      %p261 = pneg %p65
      %p262 = pneg %p62
      %p263 = pneg %p86
      %p264 = pneg %p83
      %p265 = pneg %p107
      %p266 = pneg %p104
      %p267 = pneg %p128
      %p268 = pneg %p125
      %p269 = pneg %p149
      %p270 = pneg %p146
      %p271 = pneg %p170
      %p272 = pneg %p167
      %p273 = pneg %p196
      %p274 = pneg %p193
      %p275 = scmp.lt.s32.totalorder %s18, 1
      %s276 = scalar_select %p275, %s18, 1
      %s277 = smul.addr %s276, 8
      %s278 = scalar_lea.vmem %s7, %s277
      %p279 = scmp.lt.s32.totalorder %s18, 1
      %s280 = scalar_select %p279, %s18, 1
      %s281 = smul.addr %s280, 8
      %s282 = scalar_lea.vmem %s0, %s281
      %p283 = scmp.lt.s32.totalorder %s18, 1
      %s284 = scalar_select %p283, %s18, 1
      %s285 = smul.addr %s284, 8
      %s286 = scalar_lea.vmem %s1, %s285
      %p287 = scmp.lt.s32.totalorder %s18, 1
      %s288 = scalar_select %p287, %s18, 1
      %s289 = smul.addr %s288, 8
      %s290 = scalar_lea.vmem %s7, %s289
      %v291 = vld [vmem:[%s282] sm:$0xff]
      %v292 = vld [vmem:[%s286] sm:$0xff]
      %294 = vrot.lane.b32.xlu0 %v292, 4
      %v295 = vpop.permute.xlu0 %294
      %vm297 = vcmask 31744
      %v298 = vsel %vm297, %v291, %v295
      %v299 = vld [vmem:[%s2] sm:$0x1]
      %v301 = vperm.slane %v299, 0
      %v303 = vmul.f32 %v298, %v301
      %v304 = vtanh.pop %v303
      %v305 = vmul.f32 %v304, %v304
      %v306 = vsub.f32 1.0, %v305
      %v307 = vrsqrt.pop %v306
      %v308 = vmul.f32 %v307, %v306
      %v309 = vmul.f32 %v308, %v307
      %v310 = vmul.f32 0.5, %v309
      %v311 = vsub.f32 1.5, %v310
      %v312 = vmul.f32 %v307, %v311
      %v313 = vmul.f32 %v306, %v312
      %vm314 = vcmp.eq.f32.partialorder %v306, inf
      %v315 = vsel %vm314, %v306, %v313
      %vm316 = vcmp.eq.f32.partialorder %v306, 0.0
      %v317 = vand.u32 %v306, 2147483648
      %v318 = vsel %vm316, %v317, %v315
      %320 = vrot.lane.b32.xlu0 %v318, 8
      %v321 = vpop.permute.xlu0 %320
      %vm323 = vcmask 64512
      %v324 = vsel %vm323, %v304, %v321
      %v325 = vld [vmem:[%s3] sm:$0xff]
      %v326 = vld [vmem:[%s3 + $0x8] sm:$0xff]
      %v327 = vld [vmem:[%s4] sm:$0x1]
      %v329 = vperm.slane %v327, 0
      %vm331 = vcmask 130048
      %v333 = vsel %vm331, %v324, 0
      %335 = vmatpush.msra.mxu0 0.0
      %336 = vmatpush.msra.mxu0 0.0
      %337 = vmatpush.msra.mxu0 0.0
      %338 = vmatpush.msra.mxu0 0.0
      %339 = vmatpush.msra.mxu0 0.0
      %340 = vmatpush.msra.mxu0 0.0
      %341 = vmatpush.msra.mxu0 0.0
      %342 = vmatpush.msra.mxu0 0.0
      %343 = vmatpush.msra.mxu0 0.0
      %344 = vmatpush.msra.mxu0 0.0
      %345 = vmatpush.msra.mxu0 0.0
      %346 = vmatpush.msra.mxu0 0.0
      %347 = vmatpush.msra.mxu0 0.0
      %348 = vmatpush.msra.mxu0 0.0
      %349 = vmatpush.msra.mxu0 %v326
      %350 = vmatpush.msra.mxu0 %v325
      %351 = vmatmul.f32.gmra.mxu0 %v333
      %v352 = vpop.f32.mrf.mxu0
      %v353 = vadd.f32 %v329, %v352
      %354 = vdwg.mxu0
      %v355 = vmax.f32 %v353, 0.0
      %v356 = vld [vmem:[%s5] sm:$0xff]
      %v357 = vld [vmem:[%s5 + $0x8] sm:$0xff]
      %v358 = vld [vmem:[%s5 + $0x10] sm:$0xff]
      %v359 = vld [vmem:[%s5 + $0x18] sm:$0xff]
      %v360 = vld [vmem:[%s5 + $0x20] sm:$0xff]
      %v361 = vld [vmem:[%s5 + $0x28] sm:$0xff]
      %v362 = vld [vmem:[%s5 + $0x30] sm:$0xff]
      %v363 = vld [vmem:[%s5 + $0x38] sm:$0xff]
      %v364 = vld [vmem:[%s5 + $0x40] sm:$0xff]
      %v365 = vld [vmem:[%s5 + $0x48] sm:$0xff]
      %v366 = vld [vmem:[%s5 + $0x50] sm:$0xff]
      %v367 = vld [vmem:[%s5 + $0x58] sm:$0xff]
      %v368 = vld [vmem:[%s5 + $0x60] sm:$0xff]
      %v369 = vld [vmem:[%s5 + $0x68] sm:$0xff]
      %v370 = vld [vmem:[%s5 + $0x70] sm:$0xff]
      %v371 = vld [vmem:[%s5 + $0x78] sm:$0xff]
      %v372 = vld [vmem:[%s6] sm:$0x1]
      %v374 = vperm.slane %v372, 0
      %376 = vmatpush.msra.mxu0 %v371
      %377 = vmatpush.msra.mxu0 %v370
      %378 = vmatpush.msra.mxu0 %v369
      %379 = vmatpush.msra.mxu0 %v368
      %380 = vmatpush.msra.mxu0 %v367
      %381 = vmatpush.msra.mxu0 %v366
      %382 = vmatpush.msra.mxu0 %v365
      %383 = vmatpush.msra.mxu0 %v364
      %384 = vmatpush.msra.mxu0 %v363
      %385 = vmatpush.msra.mxu0 %v362
      %386 = vmatpush.msra.mxu0 %v361
      %387 = vmatpush.msra.mxu0 %v360
      %388 = vmatpush.msra.mxu0 %v359
      %389 = vmatpush.msra.mxu0 %v358
      %390 = vmatpush.msra.mxu0 %v357
      %391 = vmatpush.msra.mxu0 %v356
      %392 = vmatmul.f32.gmra.mxu0 %v355
      %v393 = vpop.f32.mrf.mxu0
      %v394 = vadd.f32 %v374, %v393
      %395 = vdwg.mxu0
      %396 = vst.msk [vmem:[%s290] sm:$0xff] %vm297, %v394
      %p397 = scmp.lt.s32.totalorder %s18, 1
      %s398 = scalar_select %p397, %s18, 1
      %s399 = smul.addr %s398, 8
      %s400 = scalar_lea.vmem %s7, %s399
      // Predicated region
      $region49: #{tpu_custom_call.1} parent=47 // pred_check
        %p401 = pneg %p193
      $region50: #{tpu_custom_call.1} parent=47 // pred_check_branch
        %403 = sbr.rel (%p401) target = $region52
      $region51: #{tpu_custom_call.1} parent=47 // pred_region
        _
      $region52: #{tpu_custom_call.1} parent=47 // pred_fallthru
        _
    $region48: #{tpu_custom_call.1} parent=5 // pred_fallthru
      _
    %p404 = scmp.le.s32.totalorder 2, %s13
    // Predicated region
    $region53: #{tpu_custom_call.1} parent=5 // pred_check
      %p405 = pneg %p404
    $region54: #{tpu_custom_call.1} parent=5 // pred_check_branch
      %407 = sbr.rel (%p405) target = $region56
    $region55: #{tpu_custom_call.1} parent=5 // pred_region
      %s408 = ssub.s32 %s13, 2
      // Predicated region
      $region57: #{tpu_custom_call.1} parent=55 // pred_check
        %p409 = pneg %p199
      $region58: #{tpu_custom_call.1} parent=55 // pred_check_branch
        %411 = sbr.rel (%p409) target = $region60
      $region59: #{tpu_custom_call.1} parent=55 // pred_region
        %p412 = scmp.lt.s32.totalorder %s19, 1
        %s413 = scalar_select %p412, %s19, 1
        %s414 = smul.addr %s413, 8
        %s415 = scalar_lea.vmem %s7, %s414
      $region60: #{tpu_custom_call.1} parent=55 // pred_fallthru
        _
    $region56: #{tpu_custom_call.1} parent=5 // pred_fallthru
      _
  $region6: #{tpu_custom_call.1} parent=0 // loop_footer
    %s17 = sadd.s32 1, %s13
  $region7: #{tpu_custom_call.1} parent=0 // loop_footer_branch
    %12 = sbr.rel target = $region3
  $region8: #{tpu_custom_call.1} parent=0 // loop_exit
    _

</llo_original>
